<compile_context>
chip_gen: v6e
topology: v6e:2x2x1
jax: 0.10.0
libtpu: 0.0.40
codegen_flags: <defaults>
</compile_context>

<pallas_src>
import functools

import jax
import jax.numpy as jnp
from jax.experimental import pallas as pl
from jax.experimental.pallas import tpu as pltpu


def _round_up(x, m):
    return (x + m - 1) // m * m


def _clip_head_kernel(scale_ref, x_ref, w_ref, tft_ref, logits_ref, imgf_ref, acc_ref):
    """Fused: tiled image projection -> L2 normalize -> scaled similarity logits.

    scale_ref : SMEM (1,)            exp(logit_scale), precomputed in wrapper
    x_ref     : VMEM (tb, tk)        bf16 flattened-image tile
    w_ref     : VMEM (tk, D_pad)     bf16 projection-weight tile (streamed over K)
    tft_ref   : VMEM (D_pad, C_pad)  bf16 pre-transposed, pre-normalized text features
    logits_ref: VMEM (tb, C_pad)     f32 output
    imgf_ref  : VMEM (tb, D_pad)     f32 normalized image features
    acc_ref   : VMEM (tb, D_pad)     f32 accumulator scratch (resident across K)
    """
    k = pl.program_id(1)

    @pl.when(k == 0)
    def _():
        acc_ref[...] = jnp.zeros_like(acc_ref)

    # encode_image hot path: partial (tb, tk) @ (tk, D_pad) on the MXU, f32 accumulate.
    acc_ref[...] += jnp.dot(x_ref[...], w_ref[...], preferred_element_type=jnp.float32)

    @pl.when(k == pl.num_programs(1) - 1)
    def _():
        feat = acc_ref[...]                                    # (tb, D_pad) f32
        # L2 normalization along the feature (lane) axis; f32 VPU/EUP math, eps-protected
        # so all-zero (padding) rows stay finite.
        sq = jnp.sum(feat * feat, axis=-1, keepdims=True)
        inv_norm = jax.lax.rsqrt(sq + 1e-12)
        feat_n = feat * inv_norm
        imgf_ref[...] = feat_n.astype(imgf_ref.dtype)

        # logit_scale.exp() folded into the (tb, D) features (cheaper than (tb, C) when
        # C > D), then one bf16 MXU matmul against the resident pre-transposed text
        # features; no in-kernel transpose.
        scaled = (feat_n * scale_ref[0]).astype(jnp.bfloat16)
        logits_ref[...] = jnp.dot(
            scaled, tft_ref[...], preferred_element_type=jnp.float32
        ).astype(logits_ref.dtype)


@functools.partial(jax.jit, static_argnames=("tb", "tk"))
def custom_clip_forward(image_nchw, w_img, text_features, logit_scale, *, tb=None, tk=None):
    """Eval-mode CustomCLIP.forward. Returns (logits, image_features, text_features)."""
    B = image_nchw.shape[0]
    x = image_nchw.reshape(B, -1)                              # flatten NCHW -> (B, D_in)
    D_in, D = w_img.shape
    C = text_features.shape[0]

    # --- tile sizes --------------------------------------------------------
    # B-tile: at least 8 sublanes; cap at 128 rows for big batches.
    if tb is None:
        tb = 128 if B >= 128 else _round_up(max(B, 1), 8)
    # K-tile over D_in: multiple of 128; 2048 keeps double-buffered x/w tiles ~10 MiB of
    # VMEM for D up to ~768, comfortably inside every chip's physical VMEM.
    if tk is None:
        tk = min(2048, _round_up(D_in, 128))

    B_pad = _round_up(B, tb)
    K_pad = _round_up(D_in, tk)
    D_pad = _round_up(D, 128)                                  # lane-dense feature dim
    C_pad = _round_up(C, 128)                                  # lane-dense class dim

    # --- pad + cast MXU operands to bf16 (halves HBM traffic) --------------
    x_p = jnp.pad(x.astype(jnp.bfloat16), ((0, B_pad - B), (0, K_pad - D_in)))
    w_p = jnp.pad(w_img.astype(jnp.bfloat16), ((0, K_pad - D_in), (0, D_pad - D)))
    # Pre-transposed text features (D_pad, C_pad): the kernel contracts directly.
    tf_t_p = jnp.pad(
        text_features.T.astype(jnp.bfloat16), ((0, D_pad - D), (0, C_pad - C))
    )
    scale = jnp.exp(jnp.asarray(logit_scale, jnp.float32)).reshape(1)

    grid = (B_pad // tb, K_pad // tk)

    # Scoped-VMEM budget from the actual tile footprint (double-buffered inputs/outputs,
    # resident text features + accumulator), with 50% headroom; capped at v7x's 64 MiB.
    vmem_bytes = (
        2 * (tb * tk * 2)            # x tiles (bf16, double-buffered)
        + 2 * (tk * D_pad * 2)       # weight tiles (bf16, double-buffered)
        + (D_pad * C_pad * 2)        # text features (resident)
        + 2 * (tb * C_pad * 4)       # logits out
        + 2 * (tb * D_pad * 4)       # image-feature out
        + (tb * D_pad * 4)           # accumulator scratch
    )
    vmem_limit = int(min(max(vmem_bytes * 3 // 2, 16 * 1024 * 1024), 64 * 1024 * 1024))

    logits_p, imgf_p = pl.pallas_call(
        _clip_head_kernel,
        out_shape=(
            jax.ShapeDtypeStruct((B_pad, C_pad), jnp.float32),
            jax.ShapeDtypeStruct((B_pad, D_pad), jnp.float32),
        ),
        grid_spec=pltpu.PrefetchScalarGridSpec(
            num_scalar_prefetch=0,
            grid=grid,
            in_specs=[
                pl.BlockSpec(memory_space=pltpu.SMEM),                  # exp(logit_scale)
                pl.BlockSpec((tb, tk), lambda i, k: (i, k)),            # x tile
                pl.BlockSpec((tk, D_pad), lambda i, k: (k, 0)),         # weight tile (streamed)
                pl.BlockSpec((D_pad, C_pad), lambda i, k: (0, 0)),      # text feats (resident)
            ],
            out_specs=(
                pl.BlockSpec((tb, C_pad), lambda i, k: (i, 0)),         # logits
                pl.BlockSpec((tb, D_pad), lambda i, k: (i, 0)),         # image features
            ),
            scratch_shapes=[pltpu.VMEM((tb, D_pad), jnp.float32)],      # f32 accumulator
        ),
        compiler_params=pltpu.CompilerParams(
            dimension_semantics=("parallel", "arbitrary"),
            vmem_limit_bytes=vmem_limit,
        ),
    )(scale, x_p, w_p, tf_t_p)

    logits = logits_p[:B, :C]
    image_features = imgf_p[:B, :D]
    return logits, image_features, text_features


if __name__ == "__main__":
    key = jax.random.PRNGKey(0)
    k_img, k_w, k_txt = jax.random.split(key, 3)

    # Small shapes consistent with the module's forward
    B, Cch, H, W = 2, 4, 16, 16          # image: NCHW
    D_in = Cch * H * W                   # 1024
    D_feat = 32                          # CLIP embedding dim (small)
    num_classes = 8                      # number of class prompts

    image = jax.random.normal(k_img, (B, Cch, H, W), dtype=jnp.float32)

    # Synthetic image-encoder projection (stands in for clip_model.encode_image)
    w_img = jax.random.normal(k_w, (D_in, D_feat), dtype=jnp.float32) * 0.02

    # Precomputed, L2-normalized text features (as done in __init__ under no_grad)
    tf_raw = jax.random.normal(k_txt, (num_classes, D_feat), dtype=jnp.float32)
    text_features = tf_raw / jnp.linalg.norm(tf_raw, axis=-1, keepdims=True)

    # CLIP initializes logit_scale = log(1/0.07)
    logit_scale = jnp.log(jnp.float32(1.0 / 0.07))

    logits, image_features, text_feats_out = custom_clip_forward(
        image, w_img, text_features, logit_scale
    )
    jax.block_until_ready((logits, image_features, text_feats_out))

    assert logits.shape == (B, num_classes)
    assert image_features.shape == (B, D_feat)
    assert text_feats_out.shape == (num_classes, D_feat)

    # Loose correctness check vs. plain-JAX f32 reference (bf16 MXU operands in kernel).
    feat_ref = image.reshape(B, -1) @ w_img
    feat_ref = feat_ref / jnp.linalg.norm(feat_ref, axis=-1, keepdims=True)
    logits_ref = jnp.exp(logit_scale) * feat_ref @ text_features.T
    assert jnp.allclose(image_features, feat_ref, atol=5e-2), "image_features mismatch"
    assert jnp.allclose(logits, logits_ref, atol=5e-1), "logits mismatch"

    print("KERNEL_OK")
</pallas_src>

<mosaic_0001>
module attributes {stable_mosaic.version = 11 : i64} {
  func.func @_clip_head_kernel(%arg0: i32, %arg1: i32, %arg2: memref<1xf32, #tpu.memory_space<smem>>, %arg3: memref<8x1024xbf16, #tpu.memory_space<vmem>>, %arg4: memref<1024x128xbf16, #tpu.memory_space<vmem>>, %arg5: memref<128x128xbf16, #tpu.memory_space<vmem>>, %arg6: memref<8x128xf32, #tpu.memory_space<vmem>>, %arg7: memref<8x128xf32, #tpu.memory_space<vmem>>, %arg8: memref<8x128xf32, #tpu.memory_space<vmem>>) attributes {dimension_semantics = [#tpu.dimension_semantics<parallel>, #tpu.dimension_semantics<arbitrary>], iteration_bounds = array<i64: 1, 1>, scalar_prefetch = 0 : i64, scratch_operands = 1 : i64, tpu.core_type = #tpu.core_type<tc>, window_params = [{transform_indices = @transform_0, window_bounds = array<i64: 1>}, {transform_indices = @transform_1, window_bounds = array<i64: 8, 1024>}, {transform_indices = @transform_2, window_bounds = array<i64: 1024, 128>}, {pipeline_mode = #tpu.pipeline_mode<synchronous>, transform_indices = @transform_3, window_bounds = array<i64: 128, 128>}, {transform_indices = @transform_4, window_bounds = array<i64: 8, 128>}, {transform_indices = @transform_5, window_bounds = array<i64: 8, 128>}]} {
    %c0_i32 = arith.constant 0 : i32
    %0 = arith.cmpi eq, %arg1, %c0_i32 : i32
    %1 = arith.extui %0 : i1 to i32
    %c0_i32_0 = arith.constant 0 : i32
    %2 = arith.cmpi ne, %1, %c0_i32_0 : i32
    scf.if %2 {
      %cst_10 = arith.constant 0.000000e+00 : f32
      %12 = vector.broadcast %cst_10 : f32 to vector<8x128xf32>
      %c0_11 = arith.constant 0 : index
      %c0_12 = arith.constant 0 : index
      %13 = vector.load %arg8[%c0_11, %c0_12] : memref<8x128xf32, #tpu.memory_space<vmem>>, vector<8x128xf32>
      tpu.vector_store %arg8[%c0_11, %c0_12], %12 {strides = array<i32>} : memref<8x128xf32, #tpu.memory_space<vmem>>, vector<8x128xf32>,
    } else {
    }
    %c0 = arith.constant 0 : index
    %c0_1 = arith.constant 0 : index
    %3 = vector.load %arg8[%c0, %c0_1] : memref<8x128xf32, #tpu.memory_space<vmem>>, vector<8x128xf32>
    %c0_2 = arith.constant 0 : index
    %c0_3 = arith.constant 0 : index
    %4 = vector.load %arg3[%c0_2, %c0_3] : memref<8x1024xbf16, #tpu.memory_space<vmem>>, vector<8x1024xbf16>
    %c0_4 = arith.constant 0 : index
    %c0_5 = arith.constant 0 : index
    %5 = vector.load %arg4[%c0_4, %c0_5] : memref<1024x128xbf16, #tpu.memory_space<vmem>>, vector<1024x128xbf16>
    %cst = arith.constant dense<0.000000e+00> : vector<8x128xf32>
    %6 = tpu.matmul %4, %5, %cst {dimension_numbers = #tpu.dot_dimension_numbers<[1], [0], [0], [1], [0, 0, 1, 1], [], []>} : vector<8x1024xbf16>, vector<1024x128xbf16>, vector<8x128xf32> -> vector<8x128xf32>
    %7 = arith.addf %3, %6 : vector<8x128xf32>
    %c0_6 = arith.constant 0 : index
    %c0_7 = arith.constant 0 : index
    %8 = vector.load %arg8[%c0_6, %c0_7] : memref<8x128xf32, #tpu.memory_space<vmem>>, vector<8x128xf32>
    tpu.vector_store %arg8[%c0_6, %c0_7], %7 {strides = array<i32>} : memref<8x128xf32, #tpu.memory_space<vmem>>, vector<8x128xf32>,
    %c0_i32_8 = arith.constant 0 : i32
    %9 = arith.cmpi eq, %arg1, %c0_i32_8 : i32
    %10 = arith.extui %9 : i1 to i32
    %c0_i32_9 = arith.constant 0 : i32
    %11 = arith.cmpi ne, %10, %c0_i32_9 : i32
    scf.if %11 {
      %c0_10 = arith.constant 0 : index
      %c0_11 = arith.constant 0 : index
      %12 = vector.load %arg8[%c0_10, %c0_11] : memref<8x128xf32, #tpu.memory_space<vmem>>, vector<8x128xf32>
      %13 = arith.mulf %12, %12 : vector<8x128xf32>
      %cst_12 = arith.constant dense<0.000000e+00> : vector<8xf32>
      %14 = vector.multi_reduction <add>, %13, %cst_12 [1] : vector<8x128xf32> to vector<8xf32>
      %15 = vector.shape_cast %14 : vector<8xf32> to vector<8x1xf32>
      %cst_13 = arith.constant 9.99999996E-13 : f32
      %16 = vector.broadcast %cst_13 : f32 to vector<8x1xf32>
      %17 = arith.addf %15, %16 : vector<8x1xf32>
      %18 = math.rsqrt %17 : vector<8x1xf32>
      %19 = vector.broadcast %18 : vector<8x1xf32> to vector<8x128xf32>
      %20 = arith.mulf %12, %19 : vector<8x128xf32>
      %c0_14 = arith.constant 0 : index
      %c0_15 = arith.constant 0 : index
      %21 = vector.load %arg7[%c0_14, %c0_15] : memref<8x128xf32, #tpu.memory_space<vmem>>, vector<8x128xf32>
      tpu.vector_store %arg7[%c0_14, %c0_15], %20 {strides = array<i32>} : memref<8x128xf32, #tpu.memory_space<vmem>>, vector<8x128xf32>,
      %c0_16 = arith.constant 0 : index
      %22 = memref.load %arg2[%c0_16] : memref<1xf32, #tpu.memory_space<smem>>
      %23 = vector.broadcast %22 : f32 to vector<8x128xf32>
      %24 = arith.mulf %20, %23 : vector<8x128xf32>
      %25 = arith.truncf %24 : vector<8x128xf32> to vector<8x128xbf16>
      %c0_17 = arith.constant 0 : index
      %c0_18 = arith.constant 0 : index
      %26 = vector.load %arg5[%c0_17, %c0_18] : memref<128x128xbf16, #tpu.memory_space<vmem>>, vector<128x128xbf16>
      %cst_19 = arith.constant dense<0.000000e+00> : vector<8x128xf32>
      %27 = tpu.matmul %25, %26, %cst_19 {dimension_numbers = #tpu.dot_dimension_numbers<[1], [0], [0], [1], [0, 0, 1, 1], [], []>} : vector<8x128xbf16>, vector<128x128xbf16>, vector<8x128xf32> -> vector<8x128xf32>
      %c0_20 = arith.constant 0 : index
      %c0_21 = arith.constant 0 : index
      %28 = vector.load %arg6[%c0_20, %c0_21] : memref<8x128xf32, #tpu.memory_space<vmem>>, vector<8x128xf32>
      tpu.vector_store %arg6[%c0_20, %c0_21], %27 {strides = array<i32>} : memref<8x128xf32, #tpu.memory_space<vmem>>, vector<8x128xf32>,
    } else {
    }
    return
  }
  func.func @transform_0(%arg0: i32, %arg1: i32) -> i32 {
    %c0_i32 = arith.constant 0 : i32
    %c0_i32_0 = arith.constant 0 : i32
    return %c0_i32 : i32
  }
  func.func @transform_1(%arg0: i32, %arg1: i32) -> (i32, i32) {
    %c0_i32 = arith.constant 0 : i32
    return %arg0, %arg1 : i32, i32
  }
  func.func @transform_2(%arg0: i32, %arg1: i32) -> (i32, i32) {
    %c0_i32 = arith.constant 0 : i32
    %c0_i32_0 = arith.constant 0 : i32
    return %arg1, %c0_i32 : i32, i32
  }
  func.func @transform_3(%arg0: i32, %arg1: i32) -> (i32, i32) {
    %c0_i32 = arith.constant 0 : i32
    %c0_i32_0 = arith.constant 0 : i32
    %c0_i32_1 = arith.constant 0 : i32
    return %c0_i32, %c0_i32_0 : i32, i32
  }
  func.func @transform_4(%arg0: i32, %arg1: i32) -> (i32, i32) {
    %c0_i32 = arith.constant 0 : i32
    %c0_i32_0 = arith.constant 0 : i32
    return %arg0, %c0_i32 : i32, i32
  }
  func.func @transform_5(%arg0: i32, %arg1: i32) -> (i32, i32) {
    %c0_i32 = arith.constant 0 : i32
    %c0_i32_0 = arith.constant 0 : i32
    return %arg0, %c0_i32 : i32, i32
  }
}

</mosaic_0001>

<llo_original>
// kernel: custom_clip_forward.1
$region0: #{custom_clip_forward.1}
  #allocation0 [shape = 'u32[]', space=smem, size = 0x4, offset = 0x4, fixed_abs, tag = 'smem constant byte address 0x4 - core index']
  #allocation1 [shape = 'u32[144,128]{1,0:T(1,128)}', space=vmem, size = 0x12000, scoped, tag = 'internal scratch']
  #allocation2 [shape = 'f32[8,128]{1,0:T(8,128)}', space=vmem, size = 0x1000, scoped, tag = 'scratch operand']
  #allocation3 [shape = 'f32[1]{0:T(128)S(6)}', space=smem, size = 0x200, scoped, tag = 'scoped memory for custom_clip_forward.1']
  %s0 = inlined_call_operand.<no memory space> [shape: f32[1], index: 0, kind: input, shape index: {}]
  %s1 = inlined_call_operand.vmem [shape: bf16[8,1024], index: 1, kind: input, shape index: {}]
  %s2 = inlined_call_operand.vmem [shape: bf16[1024,128], index: 2, kind: input, shape index: {}]
  %s3 = inlined_call_operand.vmem [shape: bf16[128,128], index: 3, kind: input, shape index: {}]
  %s4 = inlined_call_operand.vmem [shape: f32[8,128], index: 4, kind: output, shape index: {0}]
  %s5 = inlined_call_operand.vmem [shape: f32[8,128], index: 5, kind: output, shape index: {1}]
  %6 = xla_tuple %s4, %s5
  %s7 = sld [smem:[#allocation0]]
  $region42: #{custom_clip_forward.1} parent=0
    _
  %s9 = ssub.s32 1, %s7
  %s10 = scalar_select 0, %s9, %s7
  %11 = sst [smem:[#allocation3]] %s0
  // Predicated region
  $region2: #{custom_clip_forward.1} parent=0 // pred_check
    _
  $region3: #{custom_clip_forward.1} parent=0 // pred_check_branch
    %13 = sbr.rel (0) target = $region5
  $region4: #{custom_clip_forward.1} parent=0 // pred_region
    _
  $region5: #{custom_clip_forward.1} parent=0 // pred_fallthru
    _
  // Predicated region
  $region6: #{custom_clip_forward.1} parent=0 // pred_check
    _
  $region7: #{custom_clip_forward.1} parent=0 // pred_check_branch
    %15 = sbr.rel (0) target = $region9
  $region8: #{custom_clip_forward.1} parent=0 // pred_region
    _
  $region9: #{custom_clip_forward.1} parent=0 // pred_fallthru
    _
  // Predicated region
  $region10: #{custom_clip_forward.1} parent=0 // pred_check
    _
  $region11: #{custom_clip_forward.1} parent=0 // pred_check_branch
    %17 = sbr.rel (0) target = $region13
  $region12: #{custom_clip_forward.1} parent=0 // pred_region
    _
  $region13: #{custom_clip_forward.1} parent=0 // pred_fallthru
    _
  // Predicated region
  $region14: #{custom_clip_forward.1} parent=0 // pred_check
    _
  $region15: #{custom_clip_forward.1} parent=0 // pred_check_branch
    %19 = sbr.rel (0) target = $region17
  $region16: #{custom_clip_forward.1} parent=0 // pred_region
    _
  $region17: #{custom_clip_forward.1} parent=0 // pred_fallthru
    _
  %p21 = scmp.eq.s32.totalorder 0, 0
  // Predicated region
  $region18: #{custom_clip_forward.1} parent=0 // pred_check
    %p22 = pneg %p21
  $region19: #{custom_clip_forward.1} parent=0 // pred_check_branch
    %24 = sbr.rel (%p22) target = $region21
  $region20: #{custom_clip_forward.1} parent=0 // pred_region
    %25 = vst [vmem:[#allocation2] sm:$0xff] 0.0
  $region21: #{custom_clip_forward.1} parent=0 // pred_fallthru
    _
  %v26 = vld [vmem:[#allocation2] sm:$0xff]
  %v27 = vld [vmem:[%s1] sm:$0xff]
  %v28 = vld [vmem:[%s1 + $0x8] sm:$0xff]
  %v29 = vld [vmem:[%s1 + $0x10] sm:$0xff]
  %v30 = vld [vmem:[%s1 + $0x18] sm:$0xff]
  %v31 = vld [vmem:[%s2] sm:$0xf]
  %v32 = vld [vmem:[%s2 + $0x4] sm:$0xf]
  %v33 = vld [vmem:[%s2 + $0x8] sm:$0xf]
  %v34 = vld [vmem:[%s2 + $0xc] sm:$0xf]
  %v35 = vld [vmem:[%s2 + $0x10] sm:$0xf]
  %v36 = vld [vmem:[%s2 + $0x14] sm:$0xf]
  %v37 = vld [vmem:[%s2 + $0x18] sm:$0xf]
  %v38 = vld [vmem:[%s2 + $0x1c] sm:$0xf]
  %v39 = vld [vmem:[%s2 + $0x20] sm:$0xf]
  %v40 = vld [vmem:[%s2 + $0x24] sm:$0xf]
  %v41 = vld [vmem:[%s2 + $0x28] sm:$0xf]
  %v42 = vld [vmem:[%s2 + $0x2c] sm:$0xf]
  %v43 = vld [vmem:[%s2 + $0x30] sm:$0xf]
  %v44 = vld [vmem:[%s2 + $0x34] sm:$0xf]
  %v45 = vld [vmem:[%s2 + $0x38] sm:$0xf]
  %v46 = vld [vmem:[%s2 + $0x3c] sm:$0xf]
  %v47 = vld [vmem:[%s2 + $0x40] sm:$0xf]
  %v48 = vld [vmem:[%s2 + $0x44] sm:$0xf]
  %v49 = vld [vmem:[%s2 + $0x48] sm:$0xf]
  %v50 = vld [vmem:[%s2 + $0x4c] sm:$0xf]
  %v51 = vld [vmem:[%s2 + $0x50] sm:$0xf]
  %v52 = vld [vmem:[%s2 + $0x54] sm:$0xf]
  %v53 = vld [vmem:[%s2 + $0x58] sm:$0xf]
  %v54 = vld [vmem:[%s2 + $0x5c] sm:$0xf]
  %v55 = vld [vmem:[%s2 + $0x60] sm:$0xf]
  %v56 = vld [vmem:[%s2 + $0x64] sm:$0xf]
  %v57 = vld [vmem:[%s2 + $0x68] sm:$0xf]
  %v58 = vld [vmem:[%s2 + $0x6c] sm:$0xf]
  %v59 = vld [vmem:[%s2 + $0x70] sm:$0xf]
  %v60 = vld [vmem:[%s2 + $0x74] sm:$0xf]
  %v61 = vld [vmem:[%s2 + $0x78] sm:$0xf]
  %v62 = vld [vmem:[%s2 + $0x7c] sm:$0xf]
  %v63 = vld [vmem:[%s2 + $0x80] sm:$0xf]
  %v64 = vld [vmem:[%s2 + $0x84] sm:$0xf]
  %v65 = vld [vmem:[%s2 + $0x88] sm:$0xf]
  %v66 = vld [vmem:[%s2 + $0x8c] sm:$0xf]
  %v67 = vld [vmem:[%s2 + $0x90] sm:$0xf]
  %v68 = vld [vmem:[%s2 + $0x94] sm:$0xf]
  %v69 = vld [vmem:[%s2 + $0x98] sm:$0xf]
  %v70 = vld [vmem:[%s2 + $0x9c] sm:$0xf]
  %v71 = vld [vmem:[%s2 + $0xa0] sm:$0xf]
  %v72 = vld [vmem:[%s2 + $0xa4] sm:$0xf]
  %v73 = vld [vmem:[%s2 + $0xa8] sm:$0xf]
  %v74 = vld [vmem:[%s2 + $0xac] sm:$0xf]
  %v75 = vld [vmem:[%s2 + $0xb0] sm:$0xf]
  %v76 = vld [vmem:[%s2 + $0xb4] sm:$0xf]
  %v77 = vld [vmem:[%s2 + $0xb8] sm:$0xf]
  %v78 = vld [vmem:[%s2 + $0xbc] sm:$0xf]
  %v79 = vld [vmem:[%s2 + $0xc0] sm:$0xf]
  %v80 = vld [vmem:[%s2 + $0xc4] sm:$0xf]
  %v81 = vld [vmem:[%s2 + $0xc8] sm:$0xf]
  %v82 = vld [vmem:[%s2 + $0xcc] sm:$0xf]
  %v83 = vld [vmem:[%s2 + $0xd0] sm:$0xf]
  %v84 = vld [vmem:[%s2 + $0xd4] sm:$0xf]
  %v85 = vld [vmem:[%s2 + $0xd8] sm:$0xf]
  %v86 = vld [vmem:[%s2 + $0xdc] sm:$0xf]
  %v87 = vld [vmem:[%s2 + $0xe0] sm:$0xf]
  %v88 = vld [vmem:[%s2 + $0xe4] sm:$0xf]
  %v89 = vld [vmem:[%s2 + $0xe8] sm:$0xf]
  %v90 = vld [vmem:[%s2 + $0xec] sm:$0xf]
  %v91 = vld [vmem:[%s2 + $0xf0] sm:$0xf]
  %v92 = vld [vmem:[%s2 + $0xf4] sm:$0xf]
  %v93 = vld [vmem:[%s2 + $0xf8] sm:$0xf]
  %v94 = vld [vmem:[%s2 + $0xfc] sm:$0xf]
  %v95 = vld [vmem:[%s2 + $0x100] sm:$0xf]
  %v96 = vld [vmem:[%s2 + $0x104] sm:$0xf]
  %v97 = vld [vmem:[%s2 + $0x108] sm:$0xf]
  %v98 = vld [vmem:[%s2 + $0x10c] sm:$0xf]
  %v99 = vld [vmem:[%s2 + $0x110] sm:$0xf]
  %v100 = vld [vmem:[%s2 + $0x114] sm:$0xf]
  %v101 = vld [vmem:[%s2 + $0x118] sm:$0xf]
  %v102 = vld [vmem:[%s2 + $0x11c] sm:$0xf]
  %v103 = vld [vmem:[%s2 + $0x120] sm:$0xf]
  %v104 = vld [vmem:[%s2 + $0x124] sm:$0xf]
  %v105 = vld [vmem:[%s2 + $0x128] sm:$0xf]
  %v106 = vld [vmem:[%s2 + $0x12c] sm:$0xf]
  %v107 = vld [vmem:[%s2 + $0x130] sm:$0xf]
  %v108 = vld [vmem:[%s2 + $0x134] sm:$0xf]
  %v109 = vld [vmem:[%s2 + $0x138] sm:$0xf]
  %v110 = vld [vmem:[%s2 + $0x13c] sm:$0xf]
  %v111 = vld [vmem:[%s2 + $0x140] sm:$0xf]
  %v112 = vld [vmem:[%s2 + $0x144] sm:$0xf]
  %v113 = vld [vmem:[%s2 + $0x148] sm:$0xf]
  %v114 = vld [vmem:[%s2 + $0x14c] sm:$0xf]
  %v115 = vld [vmem:[%s2 + $0x150] sm:$0xf]
  %v116 = vld [vmem:[%s2 + $0x154] sm:$0xf]
  %v117 = vld [vmem:[%s2 + $0x158] sm:$0xf]
  %v118 = vld [vmem:[%s2 + $0x15c] sm:$0xf]
  %v119 = vld [vmem:[%s2 + $0x160] sm:$0xf]
  %v120 = vld [vmem:[%s2 + $0x164] sm:$0xf]
  %v121 = vld [vmem:[%s2 + $0x168] sm:$0xf]
  %v122 = vld [vmem:[%s2 + $0x16c] sm:$0xf]
  %v123 = vld [vmem:[%s2 + $0x170] sm:$0xf]
  %v124 = vld [vmem:[%s2 + $0x174] sm:$0xf]
  %v125 = vld [vmem:[%s2 + $0x178] sm:$0xf]
  %v126 = vld [vmem:[%s2 + $0x17c] sm:$0xf]
  %v127 = vld [vmem:[%s2 + $0x180] sm:$0xf]
  %v128 = vld [vmem:[%s2 + $0x184] sm:$0xf]
  %v129 = vld [vmem:[%s2 + $0x188] sm:$0xf]
  %v130 = vld [vmem:[%s2 + $0x18c] sm:$0xf]
  %v131 = vld [vmem:[%s2 + $0x190] sm:$0xf]
  %v132 = vld [vmem:[%s2 + $0x194] sm:$0xf]
  %v133 = vld [vmem:[%s2 + $0x198] sm:$0xf]
  %v134 = vld [vmem:[%s2 + $0x19c] sm:$0xf]
  %v135 = vld [vmem:[%s2 + $0x1a0] sm:$0xf]
  %v136 = vld [vmem:[%s2 + $0x1a4] sm:$0xf]
  %v137 = vld [vmem:[%s2 + $0x1a8] sm:$0xf]
  %v138 = vld [vmem:[%s2 + $0x1ac] sm:$0xf]
  %v139 = vld [vmem:[%s2 + $0x1b0] sm:$0xf]
  %v140 = vld [vmem:[%s2 + $0x1b4] sm:$0xf]
  %v141 = vld [vmem:[%s2 + $0x1b8] sm:$0xf]
  %v142 = vld [vmem:[%s2 + $0x1bc] sm:$0xf]
  %v143 = vld [vmem:[%s2 + $0x1c0] sm:$0xf]
  %v144 = vld [vmem:[%s2 + $0x1c4] sm:$0xf]
  %v145 = vld [vmem:[%s2 + $0x1c8] sm:$0xf]
  %v146 = vld [vmem:[%s2 + $0x1cc] sm:$0xf]
  %v147 = vld [vmem:[%s2 + $0x1d0] sm:$0xf]
  %v148 = vld [vmem:[%s2 + $0x1d4] sm:$0xf]
  %v149 = vld [vmem:[%s2 + $0x1d8] sm:$0xf]
  %v150 = vld [vmem:[%s2 + $0x1dc] sm:$0xf]
  %v151 = vld [vmem:[%s2 + $0x1e0] sm:$0xf]
  %v152 = vld [vmem:[%s2 + $0x1e4] sm:$0xf]
  %v153 = vld [vmem:[%s2 + $0x1e8] sm:$0xf]
  %v154 = vld [vmem:[%s2 + $0x1ec] sm:$0xf]
  %v155 = vld [vmem:[%s2 + $0x1f0] sm:$0xf]
  %v156 = vld [vmem:[%s2 + $0x1f4] sm:$0xf]
  %v157 = vld [vmem:[%s2 + $0x1f8] sm:$0xf]
  %v158 = vld [vmem:[%s2 + $0x1fc] sm:$0xf]
  %v163 = vunpack.c.l.b16 %v27
  %v164 = vunpack.c.h.b16 %v27
  %v165 = vunpack.c.l.b16 %v28
  %v166 = vunpack.c.h.b16 %v28
  %v167 = vunpack.c.l.b16 %v29
  %v168 = vunpack.c.h.b16 %v29
  %v169 = vunpack.c.l.b16 %v30
  %v170 = vunpack.c.h.b16 %v30
  %v171 = vpack.c.b16 %v163, %v163
  %v172 = vpack.c.b16 %v164, %v164
  %v173 = vpack.c.b16 %v165, %v165
  %v174 = vpack.c.b16 %v166, %v166
  %v175 = vpack.c.b16 %v167, %v167
  %v176 = vpack.c.b16 %v168, %v168
  %v177 = vpack.c.b16 %v169, %v169
  %v178 = vpack.c.b16 %v170, %v170
  %v315 = vunpack.c.l.b16 %v31
  %v316 = vunpack.c.l.b16 %v32
  %v317 = vunpack.c.l.b16 %v33
  %v318 = vunpack.c.l.b16 %v34
  %v319 = vunpack.c.l.b16 %v35
  %v320 = vunpack.c.l.b16 %v36
  %v321 = vunpack.c.l.b16 %v37
  %v322 = vunpack.c.l.b16 %v38
  %v323 = vunpack.c.l.b16 %v39
  %v324 = vunpack.c.l.b16 %v40
  %v325 = vunpack.c.l.b16 %v41
  %v326 = vunpack.c.l.b16 %v42
  %v327 = vunpack.c.l.b16 %v43
  %v328 = vunpack.c.l.b16 %v44
  %v329 = vunpack.c.l.b16 %v45
  %v330 = vunpack.c.l.b16 %v46
  %v331 = vunpack.c.l.b16 %v47
  %v332 = vunpack.c.l.b16 %v48
  %v333 = vunpack.c.l.b16 %v49
  %v334 = vunpack.c.l.b16 %v50
  %v335 = vunpack.c.l.b16 %v51
  %v336 = vunpack.c.l.b16 %v52
  %v337 = vunpack.c.l.b16 %v53
  %v338 = vunpack.c.l.b16 %v54
  %v339 = vunpack.c.l.b16 %v55
  %v340 = vunpack.c.l.b16 %v56
  %v341 = vunpack.c.l.b16 %v57
  %v342 = vunpack.c.l.b16 %v58
  %v343 = vunpack.c.l.b16 %v59
  %v344 = vunpack.c.l.b16 %v60
  %v345 = vunpack.c.l.b16 %v61
  %v346 = vunpack.c.l.b16 %v62
  %v347 = vunpack.c.l.b16 %v63
  %v348 = vunpack.c.l.b16 %v64
  %v349 = vunpack.c.l.b16 %v65
  %v350 = vunpack.c.l.b16 %v66
  %v351 = vunpack.c.l.b16 %v67
  %v352 = vunpack.c.l.b16 %v68
  %v353 = vunpack.c.l.b16 %v69
  %v354 = vunpack.c.l.b16 %v70
  %v355 = vunpack.c.l.b16 %v71
  %v356 = vunpack.c.l.b16 %v72
  %v357 = vunpack.c.l.b16 %v73
  %v358 = vunpack.c.l.b16 %v74
  %v359 = vunpack.c.l.b16 %v75
  %v360 = vunpack.c.l.b16 %v76
  %v361 = vunpack.c.l.b16 %v77
  %v362 = vunpack.c.l.b16 %v78
  %v363 = vunpack.c.l.b16 %v79
  %v364 = vunpack.c.l.b16 %v80
  %v365 = vunpack.c.l.b16 %v81
  %v366 = vunpack.c.l.b16 %v82
  %v367 = vunpack.c.l.b16 %v83
  %v368 = vunpack.c.l.b16 %v84
  %v369 = vunpack.c.l.b16 %v85
  %v370 = vunpack.c.l.b16 %v86
  %v371 = vunpack.c.l.b16 %v87
  %v372 = vunpack.c.l.b16 %v88
  %v373 = vunpack.c.l.b16 %v89
  %v374 = vunpack.c.l.b16 %v90
  %v375 = vunpack.c.l.b16 %v91
  %v376 = vunpack.c.l.b16 %v92
  %v377 = vunpack.c.l.b16 %v93
  %v378 = vunpack.c.l.b16 %v94
  %v379 = vunpack.c.l.b16 %v95
  %v380 = vunpack.c.l.b16 %v96
  %v381 = vunpack.c.l.b16 %v97
  %v382 = vunpack.c.l.b16 %v98
  %v383 = vunpack.c.l.b16 %v99
  %v384 = vunpack.c.l.b16 %v100
  %v385 = vunpack.c.l.b16 %v101
  %v386 = vunpack.c.l.b16 %v102
  %v387 = vunpack.c.l.b16 %v103
  %v388 = vunpack.c.l.b16 %v104
  %v389 = vunpack.c.l.b16 %v105
  %v390 = vunpack.c.l.b16 %v106
  %v391 = vunpack.c.l.b16 %v107
  %v392 = vunpack.c.l.b16 %v108
  %v393 = vunpack.c.l.b16 %v109
  %v394 = vunpack.c.l.b16 %v110
  %v395 = vunpack.c.l.b16 %v111
  %v396 = vunpack.c.l.b16 %v112
  %v397 = vunpack.c.l.b16 %v113
  %v398 = vunpack.c.l.b16 %v114
  %v399 = vunpack.c.l.b16 %v115
  %v400 = vunpack.c.l.b16 %v116
  %v401 = vunpack.c.l.b16 %v117
  %v402 = vunpack.c.l.b16 %v118
  %v403 = vunpack.c.l.b16 %v119
  %v404 = vunpack.c.l.b16 %v120
  %v405 = vunpack.c.l.b16 %v121
  %v406 = vunpack.c.l.b16 %v122
  %v407 = vunpack.c.l.b16 %v123
  %v408 = vunpack.c.l.b16 %v124
  %v409 = vunpack.c.l.b16 %v125
  %v410 = vunpack.c.l.b16 %v126
  %v411 = vunpack.c.l.b16 %v127
  %v412 = vunpack.c.l.b16 %v128
  %v413 = vunpack.c.l.b16 %v129
  %v414 = vunpack.c.l.b16 %v130
  %v415 = vunpack.c.l.b16 %v131
  %v416 = vunpack.c.l.b16 %v132
  %v417 = vunpack.c.l.b16 %v133
  %v418 = vunpack.c.l.b16 %v134
  %v419 = vunpack.c.l.b16 %v135
  %v420 = vunpack.c.l.b16 %v136
  %v421 = vunpack.c.l.b16 %v137
  %v422 = vunpack.c.l.b16 %v138
  %v423 = vunpack.c.l.b16 %v139
  %v424 = vunpack.c.l.b16 %v140
  %v425 = vunpack.c.l.b16 %v141
  %v426 = vunpack.c.l.b16 %v142
  %v427 = vunpack.c.l.b16 %v143
  %v428 = vunpack.c.l.b16 %v144
  %v429 = vunpack.c.l.b16 %v145
  %v430 = vunpack.c.l.b16 %v146
  %v431 = vunpack.c.l.b16 %v147
  %v432 = vunpack.c.l.b16 %v148
  %v433 = vunpack.c.l.b16 %v149
  %v434 = vunpack.c.l.b16 %v150
  %v435 = vunpack.c.l.b16 %v151
  %v436 = vunpack.c.l.b16 %v152
  %v437 = vunpack.c.l.b16 %v153
  %v438 = vunpack.c.l.b16 %v154
  %v439 = vunpack.c.l.b16 %v155
  %v440 = vunpack.c.l.b16 %v156
  %v441 = vunpack.c.l.b16 %v157
  %v442 = vunpack.c.l.b16 %v158
  %v443 = vpack.c.b16 %v316, %v315
  %v444 = vpack.c.b16 %v318, %v317
  %v445 = vpack.c.b16 %v320, %v319
  %v446 = vpack.c.b16 %v322, %v321
  %v447 = vpack.c.b16 %v324, %v323
  %v448 = vpack.c.b16 %v326, %v325
  %v449 = vpack.c.b16 %v328, %v327
  %v450 = vpack.c.b16 %v330, %v329
  %v451 = vpack.c.b16 %v332, %v331
  %v452 = vpack.c.b16 %v334, %v333
  %v453 = vpack.c.b16 %v336, %v335
  %v454 = vpack.c.b16 %v338, %v337
  %v455 = vpack.c.b16 %v340, %v339
  %v456 = vpack.c.b16 %v342, %v341
  %v457 = vpack.c.b16 %v344, %v343
  %v458 = vpack.c.b16 %v346, %v345
  %v459 = vpack.c.b16 %v348, %v347
  %v460 = vpack.c.b16 %v350, %v349
  %v461 = vpack.c.b16 %v352, %v351
  %v462 = vpack.c.b16 %v354, %v353
  %v463 = vpack.c.b16 %v356, %v355
  %v464 = vpack.c.b16 %v358, %v357
  %v465 = vpack.c.b16 %v360, %v359
  %v466 = vpack.c.b16 %v362, %v361
  %v467 = vpack.c.b16 %v364, %v363
  %v468 = vpack.c.b16 %v366, %v365
  %v469 = vpack.c.b16 %v368, %v367
  %v470 = vpack.c.b16 %v370, %v369
  %v471 = vpack.c.b16 %v372, %v371
  %v472 = vpack.c.b16 %v374, %v373
  %v473 = vpack.c.b16 %v376, %v375
  %v474 = vpack.c.b16 %v378, %v377
  %v475 = vpack.c.b16 %v380, %v379
  %v476 = vpack.c.b16 %v382, %v381
  %v477 = vpack.c.b16 %v384, %v383
  %v478 = vpack.c.b16 %v386, %v385
  %v479 = vpack.c.b16 %v388, %v387
  %v480 = vpack.c.b16 %v390, %v389
  %v481 = vpack.c.b16 %v392, %v391
  %v482 = vpack.c.b16 %v394, %v393
  %v483 = vpack.c.b16 %v396, %v395
  %v484 = vpack.c.b16 %v398, %v397
  %v485 = vpack.c.b16 %v400, %v399
  %v486 = vpack.c.b16 %v402, %v401
  %v487 = vpack.c.b16 %v404, %v403
  %v488 = vpack.c.b16 %v406, %v405
  %v489 = vpack.c.b16 %v408, %v407
  %v490 = vpack.c.b16 %v410, %v409
  %v491 = vpack.c.b16 %v412, %v411
  %v492 = vpack.c.b16 %v414, %v413
  %v493 = vpack.c.b16 %v416, %v415
  %v494 = vpack.c.b16 %v418, %v417
  %v495 = vpack.c.b16 %v420, %v419
  %v496 = vpack.c.b16 %v422, %v421
  %v497 = vpack.c.b16 %v424, %v423
  %v498 = vpack.c.b16 %v426, %v425
  %v499 = vpack.c.b16 %v428, %v427
  %v500 = vpack.c.b16 %v430, %v429
  %v501 = vpack.c.b16 %v432, %v431
  %v502 = vpack.c.b16 %v434, %v433
  %v503 = vpack.c.b16 %v436, %v435
  %v504 = vpack.c.b16 %v438, %v437
  %v505 = vpack.c.b16 %v440, %v439
  %v506 = vpack.c.b16 %v442, %v441
  %571 = vmatprep.subr.bf16.mxu0 0
  %572 = vmatpush1.bf16.msra.mxu0 %v450
  %573 = vmatprep.subr.bf16.mxu0 0
  %574 = vmatpush1.bf16.msra.mxu0 %v449
  %575 = vmatprep.subr.bf16.mxu0 0
  %576 = vmatpush1.bf16.msra.mxu0 %v448
  %577 = vmatprep.subr.bf16.mxu0 0
  %578 = vmatpush1.bf16.msra.mxu0 %v447
  %579 = vmatprep.subr.bf16.mxu0 0
  %580 = vmatpush1.bf16.msra.mxu0 %v446
  %581 = vmatprep.subr.bf16.mxu0 0
  %582 = vmatpush1.bf16.msra.mxu0 %v445
  %583 = vmatprep.subr.bf16.mxu0 0
  %584 = vmatpush1.bf16.msra.mxu0 %v444
  %585 = vmatprep.subr.bf16.mxu0 0
  %586 = vmatpush1.bf16.msra.mxu0 %v443
  %587 = vmatprep.subr.bf16.mxu0 0
  %588 = vmatpush2.bf16.msra.mxu0 %v458
  %589 = vmatprep.subr.bf16.mxu0 0
  %590 = vmatpush2.bf16.msra.mxu0 %v457
  %591 = vmatprep.subr.bf16.mxu0 0
  %592 = vmatpush2.bf16.msra.mxu0 %v456
  %593 = vmatprep.subr.bf16.mxu0 0
  %594 = vmatpush2.bf16.msra.mxu0 %v455
  %595 = vmatprep.subr.bf16.mxu0 0
  %596 = vmatpush2.bf16.msra.mxu0 %v454
  %597 = vmatprep.subr.bf16.mxu0 0
  %598 = vmatpush2.bf16.msra.mxu0 %v453
  %599 = vmatprep.subr.bf16.mxu0 0
  %600 = vmatpush2.bf16.msra.mxu0 %v452
  %601 = vmatprep.subr.bf16.mxu0 0
  %602 = vmatpush2.bf16.msra.mxu0 %v451
  %603 = vmatprep.mubr.bf16.mxu0 %v172
  %604 = vmatmul.mubr.bf16.gmra.mxu0 %v171
  %v605 = vpop.f32.mrf.mxu0
  %v606 = vadd.f32 0.0, %v605
  %v607 = vpop.f32.mrf.mxu0
  %v608 = vpop.f32.mrf.mxu0
  %v609 = vpop.f32.mrf.mxu0
  %610 = vdwg.mxu0
  %611 = vmatprep.subr.bf16.mxu0 0
  %612 = vmatpush1.bf16.msra.mxu0 %v466
  %613 = vmatprep.subr.bf16.mxu0 0
  %614 = vmatpush1.bf16.msra.mxu0 %v465
  %615 = vmatprep.subr.bf16.mxu0 0
  %616 = vmatpush1.bf16.msra.mxu0 %v464
  %617 = vmatprep.subr.bf16.mxu0 0
  %618 = vmatpush1.bf16.msra.mxu0 %v463
  %619 = vmatprep.subr.bf16.mxu0 0
  %620 = vmatpush1.bf16.msra.mxu0 %v462
  %621 = vmatprep.subr.bf16.mxu0 0
  %622 = vmatpush1.bf16.msra.mxu0 %v461
  %623 = vmatprep.subr.bf16.mxu0 0
  %624 = vmatpush1.bf16.msra.mxu0 %v460
  %625 = vmatprep.subr.bf16.mxu0 0
  %626 = vmatpush1.bf16.msra.mxu0 %v459
  %627 = vmatprep.subr.bf16.mxu0 0
  %628 = vmatpush2.bf16.msra.mxu0 %v474
  %629 = vmatprep.subr.bf16.mxu0 0
  %630 = vmatpush2.bf16.msra.mxu0 %v473
  %631 = vmatprep.subr.bf16.mxu0 0
  %632 = vmatpush2.bf16.msra.mxu0 %v472
  %633 = vmatprep.subr.bf16.mxu0 0
  %634 = vmatpush2.bf16.msra.mxu0 %v471
  %635 = vmatprep.subr.bf16.mxu0 0
  %636 = vmatpush2.bf16.msra.mxu0 %v470
  %637 = vmatprep.subr.bf16.mxu0 0
  %638 = vmatpush2.bf16.msra.mxu0 %v469
  %639 = vmatprep.subr.bf16.mxu0 0
  %640 = vmatpush2.bf16.msra.mxu0 %v468
  %641 = vmatprep.subr.bf16.mxu0 0
  %642 = vmatpush2.bf16.msra.mxu0 %v467
  %643 = vmatprep.mubr.bf16.mxu0 %v174
  %644 = vmatmul.mubr.bf16.gmra.mxu0 %v173
  %v645 = vpop.f32.mrf.mxu0
  %v646 = vadd.f32 %v606, %v645
  %v647 = vpop.f32.mrf.mxu0
  %v648 = vpop.f32.mrf.mxu0
  %v649 = vpop.f32.mrf.mxu0
  %650 = vdwg.mxu0
  %651 = vmatprep.subr.bf16.mxu0 0
  %652 = vmatpush1.bf16.msra.mxu0 %v482
  %653 = vmatprep.subr.bf16.mxu0 0
  %654 = vmatpush1.bf16.msra.mxu0 %v481
  %655 = vmatprep.subr.bf16.mxu0 0
  %656 = vmatpush1.bf16.msra.mxu0 %v480
  %657 = vmatprep.subr.bf16.mxu0 0
  %658 = vmatpush1.bf16.msra.mxu0 %v479
  %659 = vmatprep.subr.bf16.mxu0 0
  %660 = vmatpush1.bf16.msra.mxu0 %v478
  %661 = vmatprep.subr.bf16.mxu0 0
  %662 = vmatpush1.bf16.msra.mxu0 %v477
  %663 = vmatprep.subr.bf16.mxu0 0
  %664 = vmatpush1.bf16.msra.mxu0 %v476
  %665 = vmatprep.subr.bf16.mxu0 0
  %666 = vmatpush1.bf16.msra.mxu0 %v475
  %667 = vmatprep.subr.bf16.mxu0 0
  %668 = vmatpush2.bf16.msra.mxu0 %v490
  %669 = vmatprep.subr.bf16.mxu0 0
  %670 = vmatpush2.bf16.msra.mxu0 %v489
  %671 = vmatprep.subr.bf16.mxu0 0
  %672 = vmatpush2.bf16.msra.mxu0 %v488
  %673 = vmatprep.subr.bf16.mxu0 0
  %674 = vmatpush2.bf16.msra.mxu0 %v487
  %675 = vmatprep.subr.bf16.mxu0 0
  %676 = vmatpush2.bf16.msra.mxu0 %v486
  %677 = vmatprep.subr.bf16.mxu0 0
  %678 = vmatpush2.bf16.msra.mxu0 %v485
  %679 = vmatprep.subr.bf16.mxu0 0
  %680 = vmatpush2.bf16.msra.mxu0 %v484
  %681 = vmatprep.subr.bf16.mxu0 0
  %682 = vmatpush2.bf16.msra.mxu0 %v483
  %683 = vmatprep.mubr.bf16.mxu0 %v176
  %684 = vmatmul.mubr.bf16.gmra.mxu0 %v175
  %v685 = vpop.f32.mrf.mxu0
  %v686 = vadd.f32 %v646, %v685
  %v687 = vpop.f32.mrf.mxu0
  %v688 = vpop.f32.mrf.mxu0
  %v689 = vpop.f32.mrf.mxu0
  %690 = vdwg.mxu0
  %691 = vmatprep.subr.bf16.mxu0 0
  %692 = vmatpush1.bf16.msra.mxu0 %v498
  %693 = vmatprep.subr.bf16.mxu0 0
  %694 = vmatpush1.bf16.msra.mxu0 %v497
  %695 = vmatprep.subr.bf16.mxu0 0
  %696 = vmatpush1.bf16.msra.mxu0 %v496
  %697 = vmatprep.subr.bf16.mxu0 0
  %698 = vmatpush1.bf16.msra.mxu0 %v495
  %699 = vmatprep.subr.bf16.mxu0 0
  %700 = vmatpush1.bf16.msra.mxu0 %v494
  %701 = vmatprep.subr.bf16.mxu0 0
  %702 = vmatpush1.bf16.msra.mxu0 %v493
  %703 = vmatprep.subr.bf16.mxu0 0
  %704 = vmatpush1.bf16.msra.mxu0 %v492
  %705 = vmatprep.subr.bf16.mxu0 0
  %706 = vmatpush1.bf16.msra.mxu0 %v491
  %707 = vmatprep.subr.bf16.mxu0 0
  %708 = vmatpush2.bf16.msra.mxu0 %v506
  %709 = vmatprep.subr.bf16.mxu0 0
  %710 = vmatpush2.bf16.msra.mxu0 %v505
  %711 = vmatprep.subr.bf16.mxu0 0
  %712 = vmatpush2.bf16.msra.mxu0 %v504
  %713 = vmatprep.subr.bf16.mxu0 0
  %714 = vmatpush2.bf16.msra.mxu0 %v503
  %715 = vmatprep.subr.bf16.mxu0 0
  %716 = vmatpush2.bf16.msra.mxu0 %v502
  %717 = vmatprep.subr.bf16.mxu0 0
  %718 = vmatpush2.bf16.msra.mxu0 %v501
  %719 = vmatprep.subr.bf16.mxu0 0
  %720 = vmatpush2.bf16.msra.mxu0 %v500
  %721 = vmatprep.subr.bf16.mxu0 0
  %722 = vmatpush2.bf16.msra.mxu0 %v499
  %723 = vmatprep.mubr.bf16.mxu0 %v178
  %724 = vmatmul.mubr.bf16.gmra.mxu0 %v177
  %v725 = vpop.f32.mrf.mxu0
  %v726 = vadd.f32 %v686, %v725
  %v727 = vpop.f32.mrf.mxu0
  %v728 = vpop.f32.mrf.mxu0
  %v729 = vpop.f32.mrf.mxu0
  %730 = vdwg.mxu0
  %v731 = vadd.f32 %v26, %v726
  %732 = vst [vmem:[#allocation2] sm:$0xff] %v731
  // Predicated region
  $region22: #{custom_clip_forward.1} parent=0 // pred_check
    %p733 = pneg %p21
  $region23: #{custom_clip_forward.1} parent=0 // pred_check_branch
    %735 = sbr.rel (%p733) target = $region25
  $region24: #{custom_clip_forward.1} parent=0 // pred_region
    %v736 = vld [vmem:[#allocation2] sm:$0xff]
    %v737 = vmul.f32 %v736, %v736
    %738 = vadd.xlane.f32.xlu0 %v737
    %v739 = vpop.xlane.xlu0 %738
    %v740 = vadd.f32 %v739, 1e-12
    %v741 = vrsqrt.pop %v740
    %v742 = vmul.f32 %v736, %v741
    %743 = vst [vmem:[%s5] sm:$0xff] %v742
    %s744 = sld [smem:[#allocation3]]
    %v745 = vstv %s744
    %v746 = vmul.f32 %v742, %v745
    %v747 = vpack.c.bf16 %v746, %v746
    %v748 = vld [vmem:[%s3] sm:$0xf]
    %v749 = vld [vmem:[%s3 + $0x4] sm:$0xf]
    %v750 = vld [vmem:[%s3 + $0x8] sm:$0xf]
    %v751 = vld [vmem:[%s3 + $0xc] sm:$0xf]
    %v752 = vld [vmem:[%s3 + $0x10] sm:$0xf]
    %v753 = vld [vmem:[%s3 + $0x14] sm:$0xf]
    %v754 = vld [vmem:[%s3 + $0x18] sm:$0xf]
    %v755 = vld [vmem:[%s3 + $0x1c] sm:$0xf]
    %v756 = vld [vmem:[%s3 + $0x20] sm:$0xf]
    %v757 = vld [vmem:[%s3 + $0x24] sm:$0xf]
    %v758 = vld [vmem:[%s3 + $0x28] sm:$0xf]
    %v759 = vld [vmem:[%s3 + $0x2c] sm:$0xf]
    %v760 = vld [vmem:[%s3 + $0x30] sm:$0xf]
    %v761 = vld [vmem:[%s3 + $0x34] sm:$0xf]
    %v762 = vld [vmem:[%s3 + $0x38] sm:$0xf]
    %v763 = vld [vmem:[%s3 + $0x3c] sm:$0xf]
    %v780 = vunpack.c.l.b16 %v748
    %v781 = vunpack.c.l.b16 %v749
    %v782 = vunpack.c.l.b16 %v750
    %v783 = vunpack.c.l.b16 %v751
    %v784 = vunpack.c.l.b16 %v752
    %v785 = vunpack.c.l.b16 %v753
    %v786 = vunpack.c.l.b16 %v754
    %v787 = vunpack.c.l.b16 %v755
    %v788 = vunpack.c.l.b16 %v756
    %v789 = vunpack.c.l.b16 %v757
    %v790 = vunpack.c.l.b16 %v758
    %v791 = vunpack.c.l.b16 %v759
    %v792 = vunpack.c.l.b16 %v760
    %v793 = vunpack.c.l.b16 %v761
    %v794 = vunpack.c.l.b16 %v762
    %v795 = vunpack.c.l.b16 %v763
    %v796 = vpack.c.b16 %v781, %v780
    %v797 = vpack.c.b16 %v783, %v782
    %v798 = vpack.c.b16 %v785, %v784
    %v799 = vpack.c.b16 %v787, %v786
    %v800 = vpack.c.b16 %v789, %v788
    %v801 = vpack.c.b16 %v791, %v790
    %v802 = vpack.c.b16 %v793, %v792
    %v803 = vpack.c.b16 %v795, %v794
    %812 = vmatprep.subr.bf16.mxu0 0
    %813 = vmatpush1.bf16.msra.mxu0 %v803
    %814 = vmatprep.subr.bf16.mxu0 0
    %815 = vmatpush1.bf16.msra.mxu0 %v802
    %816 = vmatprep.subr.bf16.mxu0 0
    %817 = vmatpush1.bf16.msra.mxu0 %v801
    %818 = vmatprep.subr.bf16.mxu0 0
    %819 = vmatpush1.bf16.msra.mxu0 %v800
    %820 = vmatprep.subr.bf16.mxu0 0
    %821 = vmatpush1.bf16.msra.mxu0 %v799
    %822 = vmatprep.subr.bf16.mxu0 0
    %823 = vmatpush1.bf16.msra.mxu0 %v798
    %824 = vmatprep.subr.bf16.mxu0 0
    %825 = vmatpush1.bf16.msra.mxu0 %v797
    %826 = vmatprep.subr.bf16.mxu0 0
    %827 = vmatpush1.bf16.msra.mxu0 %v796
    %828 = vmatprep.subr.bf16.mxu0 0
    %829 = vmatpush2.bf16.msra.mxu0 0
    %830 = vmatprep.subr.bf16.mxu0 0
    %831 = vmatpush2.bf16.msra.mxu0 0
    %832 = vmatprep.subr.bf16.mxu0 0
    %833 = vmatpush2.bf16.msra.mxu0 0
    %834 = vmatprep.subr.bf16.mxu0 0
    %835 = vmatpush2.bf16.msra.mxu0 0
    %836 = vmatprep.subr.bf16.mxu0 0
    %837 = vmatpush2.bf16.msra.mxu0 0
    %838 = vmatprep.subr.bf16.mxu0 0
    %839 = vmatpush2.bf16.msra.mxu0 0
    %840 = vmatprep.subr.bf16.mxu0 0
    %841 = vmatpush2.bf16.msra.mxu0 0
    %842 = vmatprep.subr.bf16.mxu0 0
    %843 = vmatpush2.bf16.msra.mxu0 0
    %844 = vmatprep.mubr.bf16.mxu0 0
    %845 = vmatmul.mubr.bf16.gmra.mxu0 %v747
    %v846 = vpop.f32.mrf.mxu0
    %v847 = vadd.f32 0.0, %v846
    %v848 = vpop.f32.mrf.mxu0
    %v849 = vpop.f32.mrf.mxu0
    %v850 = vpop.f32.mrf.mxu0
    %851 = vdwg.mxu0
    %852 = vst [vmem:[%s4] sm:$0xff] %v847
  $region25: #{custom_clip_forward.1} parent=0 // pred_fallthru
    _
  // Predicated region
  $region26: #{custom_clip_forward.1} parent=0 // pred_check
    _
  $region27: #{custom_clip_forward.1} parent=0 // pred_check_branch
    %854 = sbr.rel (0) target = $region29
  $region28: #{custom_clip_forward.1} parent=0 // pred_region
    _
  $region29: #{custom_clip_forward.1} parent=0 // pred_fallthru
    _
  // Predicated region
  $region30: #{custom_clip_forward.1} parent=0 // pred_check
    _
  $region31: #{custom_clip_forward.1} parent=0 // pred_check_branch
    %856 = sbr.rel (0) target = $region33
  $region32: #{custom_clip_forward.1} parent=0 // pred_region
    _
  $region33: #{custom_clip_forward.1} parent=0 // pred_fallthru
    _
  // Predicated region
  $region34: #{custom_clip_forward.1} parent=0 // pred_check
    _
  $region35: #{custom_clip_forward.1} parent=0 // pred_check_branch
    %858 = sbr.rel (0) target = $region37
  $region36: #{custom_clip_forward.1} parent=0 // pred_region
    _
  $region37: #{custom_clip_forward.1} parent=0 // pred_fallthru
    _
  // Predicated region
  $region38: #{custom_clip_forward.1} parent=0 // pred_check
    _
  $region39: #{custom_clip_forward.1} parent=0 // pred_check_branch
    %860 = sbr.rel (0) target = $region41
  $region40: #{custom_clip_forward.1} parent=0 // pred_region
    _
  $region41: #{custom_clip_forward.1} parent=0 // pred_fallthru
    _

</llo_original>
